<compile_context>
chip_gen: v6e
topology: v6e:2x2x1
jax: 0.10.0
libtpu: 0.0.40
codegen_flags: <defaults>
</compile_context>

<pallas_src>
import jax
import jax.numpy as jnp
from jax.experimental import pallas as pl
from jax.experimental.pallas import tpu as pltpu

# ---- STL hyper-parameters (defaults of the PyTorch module) ----
REF_DIM = 128
NUM_HEADS = 4
TOKEN_NUM = 10
TOKEN_DIM = 128
D_K = TOKEN_DIM // NUM_HEADS        # key_dim = 32
HEAD_DIM = TOKEN_DIM // NUM_HEADS   # per-head width of num_units = 32
HT = NUM_HEADS * TOKEN_NUM          # 40 = all heads' scores side by side


def stl_kernel(x_ref, wq_ref, kbd_ref, vbd_ref, gbd_ref, o_ref):
    """One batch tile of the STL forward.

    x_ref   : (TILE_N, REF_DIM)    f32  inputs tile (streamed)
    wq_ref  : (REF_DIM, TOKEN_DIM) f32  W_query^T * 1/sqrt(d_k)   (resident)
    kbd_ref : (TOKEN_DIM, HT)      f32  block-diagonal K^T        (resident)
    vbd_ref : (HT, TOKEN_DIM)      f32  block-structured V        (resident)
    gbd_ref : (HT, TOKEN_DIM)      f32  0/1 head-group broadcast  (resident)
    o_ref   : (TILE_N, TOKEN_DIM)  f32  output tile
    """
    # scale already folded into wq
    q = jnp.dot(x_ref[...], wq_ref[...], preferred_element_type=jnp.float32)
    # all-head scores in one lane-dense matmul:
    #   s[:, h*10:(h+1)*10] = q[:, h*32:(h+1)*32] @ K_h^T
    s = jnp.dot(q, kbd_ref[...], preferred_element_type=jnp.float32)      # (tn, 40)
    # Per-row global max: it is a single constant per row, hence constant
    # within every head group, so the grouped softmax is unchanged and the
    # exp arguments stay <= 0 (numerically stable).
    s = s - jnp.max(s, axis=-1, keepdims=True)
    p = jnp.exp(s)                                                        # (tn, 40)
    # unnormalized per-head outputs and per-head denominators, both broadcast
    # onto the full 128-lane output layout in one matmul each
    out = jnp.dot(p, vbd_ref[...], preferred_element_type=jnp.float32)    # (tn, 128)
    den = jnp.dot(p, gbd_ref[...], preferred_element_type=jnp.float32)    # (tn, 128)
    o_ref[...] = out * pl.reciprocal(den, approx=True)


def _fold_params(embed, wq_t, wk_t, wv_t):
    """Parameter-only precompute hoisted out of the kernel (runs once)."""
    scale = 1.0 / (float(D_K) ** 0.5)
    wq_scaled = (wq_t * scale).astype(jnp.float32)        # fold 1/sqrt(d_k)
    keys_in = jnp.tanh(embed.astype(jnp.float32))          # (T, d_k)
    k = keys_in @ wk_t.astype(jnp.float32)                 # (T, U)
    v = keys_in @ wv_t.astype(jnp.float32)                 # (T, U)
    kbd = jnp.zeros((TOKEN_DIM, HT), jnp.float32)
    vbd = jnp.zeros((HT, TOKEN_DIM), jnp.float32)
    gbd = jnp.zeros((HT, TOKEN_DIM), jnp.float32)
    for h in range(NUM_HEADS):
        r = slice(h * HEAD_DIM, (h + 1) * HEAD_DIM)        # 32-wide feature block
        c = slice(h * TOKEN_NUM, (h + 1) * TOKEN_NUM)      # 10-wide score block
        kbd = kbd.at[r, c].set(k[:, r].T)
        vbd = vbd.at[c, r].set(v[:, r])
        gbd = gbd.at[c, r].set(1.0)
    return wq_scaled, kbd, vbd, gbd


def stl_forward(x, embed, wq_t, wk_t, wv_t, *, tile_n=512):
    """x: (N, REF_DIM) -> (N, 1, TOKEN_DIM), matching STL.forward."""
    n = x.shape[0]
    x = x.astype(jnp.float32)
    wq_s, kbd, vbd, gbd = _fold_params(embed, wq_t, wk_t, wv_t)

    # Pad batch to a multiple of 8 so tiles satisfy the (8, 128) layout rule.
    n_pad = -(-n // 8) * 8
    if n_pad != n:
        x = jnp.pad(x, ((0, n_pad - n), (0, 0)))
    tn = min(tile_n, n_pad)                 # 512x128 f32 tile = 256 KiB; safe on v7x
    grid = (pl.cdiv(n_pad, tn),)

    # Advisory cost hint for XLA scheduling around the custom call.
    flops = 2 * n_pad * (REF_DIM * TOKEN_DIM + TOKEN_DIM * HT + 2 * HT * TOKEN_DIM)
    bytes_accessed = 4 * (n_pad * (REF_DIM + TOKEN_DIM)
                          + REF_DIM * TOKEN_DIM + 3 * HT * TOKEN_DIM)
    cost = pl.CostEstimate(flops=flops,
                           transcendentals=n_pad * (HT + TOKEN_DIM),
                           bytes_accessed=bytes_accessed)

    # Note: on v6e/v7x, casting x / wq to bf16 would halve the dominant HBM
    # stream; kept f32 here to match the f32 reference tolerance exactly.
    out = pl.pallas_call(
        stl_kernel,
        out_shape=jax.ShapeDtypeStruct((n_pad, TOKEN_DIM), jnp.float32),
        grid_spec=pltpu.PrefetchScalarGridSpec(
            num_scalar_prefetch=0,
            grid=grid,
            in_specs=[
                pl.BlockSpec((tn, REF_DIM), lambda i: (i, 0)),          # streamed x
                pl.BlockSpec((REF_DIM, TOKEN_DIM), lambda i: (0, 0)),   # resident
                pl.BlockSpec((TOKEN_DIM, HT), lambda i: (0, 0)),        # resident
                pl.BlockSpec((HT, TOKEN_DIM), lambda i: (0, 0)),        # resident
                pl.BlockSpec((HT, TOKEN_DIM), lambda i: (0, 0)),        # resident
            ],
            out_specs=pl.BlockSpec((tn, TOKEN_DIM), lambda i: (i, 0)),
        ),
        compiler_params=pltpu.CompilerParams(
            dimension_semantics=("parallel",)),
        cost_estimate=cost,
    )(x, wq_s, kbd, vbd, gbd)

    return out[:n].reshape(n, 1, TOKEN_DIM)


def stl_reference(x, embed, wq_t, wk_t, wv_t):
    """Pure-JAX reference mirroring the PyTorch math (per-head, unfused)."""
    keys_in = jnp.tanh(embed)
    q = x @ wq_t                       # (N, U)
    k = keys_in @ wk_t                 # (T, U)
    v = keys_in @ wv_t                 # (T, U)
    n = x.shape[0]
    qh = q.reshape(n, NUM_HEADS, HEAD_DIM).transpose(1, 0, 2)           # (H, N, hd)
    kh = k.reshape(TOKEN_NUM, NUM_HEADS, HEAD_DIM).transpose(1, 0, 2)   # (H, T, hd)
    vh = v.reshape(TOKEN_NUM, NUM_HEADS, HEAD_DIM).transpose(1, 0, 2)   # (H, T, hd)
    s = jnp.einsum("hnd,htd->hnt", qh, kh) / (float(D_K) ** 0.5)
    p = jax.nn.softmax(s, axis=-1)
    o = jnp.einsum("hnt,htd->hnd", p, vh)                               # (H, N, hd)
    o = o.transpose(1, 0, 2).reshape(n, TOKEN_DIM)
    return o.reshape(n, 1, TOKEN_DIM)


if __name__ == "__main__":
    key = jax.random.PRNGKey(0)
    k_x, k_e, k_q, k_k, k_v = jax.random.split(key, 5)

    N = 16  # small batch; tile_n=8 below exercises a 2-step grid

    x = jax.random.normal(k_x, (N, REF_DIM), dtype=jnp.float32)
    embed = 0.5 * jax.random.normal(k_e, (TOKEN_NUM, D_K), dtype=jnp.float32)
    # nn.Linear weights are (out, in); stored transposed as (in, out).
    wq_t = (0.1 * jax.random.normal(k_q, (TOKEN_DIM, REF_DIM), dtype=jnp.float32)).T
    wk_t = (0.1 * jax.random.normal(k_k, (TOKEN_DIM, D_K), dtype=jnp.float32)).T
    wv_t = (0.1 * jax.random.normal(k_v, (TOKEN_DIM, D_K), dtype=jnp.float32)).T

    out = stl_forward(x, embed, wq_t, wk_t, wv_t, tile_n=8)
    out = jax.block_until_ready(out)

    ref = stl_reference(x, embed, wq_t, wk_t, wv_t)
    assert out.shape == (N, 1, TOKEN_DIM), out.shape
    err = float(jnp.max(jnp.abs(out - ref)))
    # tolerance accounts for the approximate (EUP) reciprocal in the softmax
    assert err < 2e-3, f"mismatch vs JAX reference (max abs err = {err})"

    print("KERNEL_OK")
</pallas_src>

<mosaic_0001>
module attributes {stable_mosaic.version = 11 : i64} {
  func.func @stl_kernel(%arg0: i32, %arg1: memref<8x128xf32, #tpu.memory_space<vmem>>, %arg2: memref<128x128xf32, #tpu.memory_space<vmem>>, %arg3: memref<128x40xf32, #tpu.memory_space<vmem>>, %arg4: memref<40x128xf32, #tpu.memory_space<vmem>>, %arg5: memref<40x128xf32, #tpu.memory_space<vmem>>, %arg6: memref<8x128xf32, #tpu.memory_space<vmem>>) attributes {dimension_semantics = [#tpu.dimension_semantics<parallel>], iteration_bounds = array<i64: 2>, scalar_prefetch = 0 : i64, scratch_operands = 0 : i64, tpu.core_type = #tpu.core_type<tc>, window_params = [{transform_indices = @transform_0, window_bounds = array<i64: 8, 128>}, {pipeline_mode = #tpu.pipeline_mode<synchronous>, transform_indices = @transform_1, window_bounds = array<i64: 128, 128>}, {pipeline_mode = #tpu.pipeline_mode<synchronous>, transform_indices = @transform_2, window_bounds = array<i64: 128, 40>}, {pipeline_mode = #tpu.pipeline_mode<synchronous>, transform_indices = @transform_3, window_bounds = array<i64: 40, 128>}, {pipeline_mode = #tpu.pipeline_mode<synchronous>, transform_indices = @transform_4, window_bounds = array<i64: 40, 128>}, {transform_indices = @transform_5, window_bounds = array<i64: 8, 128>}]} {
    %c0 = arith.constant 0 : index
    %c0_0 = arith.constant 0 : index
    %0 = vector.load %arg1[%c0, %c0_0] : memref<8x128xf32, #tpu.memory_space<vmem>>, vector<8x128xf32>
    %c0_1 = arith.constant 0 : index
    %c0_2 = arith.constant 0 : index
    %1 = vector.load %arg2[%c0_1, %c0_2] : memref<128x128xf32, #tpu.memory_space<vmem>>, vector<128x128xf32>
    %cst = arith.constant dense<0.000000e+00> : vector<8x128xf32>
    %2 = tpu.matmul %0, %1, %cst {dimension_numbers = #tpu.dot_dimension_numbers<[1], [0], [0], [1], [0, 0, 1, 1], [], []>} : vector<8x128xf32>, vector<128x128xf32>, vector<8x128xf32> -> vector<8x128xf32>
    %c0_3 = arith.constant 0 : index
    %c0_4 = arith.constant 0 : index
    %3 = vector.load %arg3[%c0_3, %c0_4] : memref<128x40xf32, #tpu.memory_space<vmem>>, vector<128x40xf32>
    %cst_5 = arith.constant dense<0.000000e+00> : vector<8x40xf32>
    %4 = tpu.matmul %2, %3, %cst_5 {dimension_numbers = #tpu.dot_dimension_numbers<[1], [0], [0], [1], [0, 0, 1, 1], [], []>} : vector<8x128xf32>, vector<128x40xf32>, vector<8x40xf32> -> vector<8x40xf32>
    %cst_6 = arith.constant dense<0xFF800000> : vector<8xf32>
    %5 = vector.multi_reduction <maximumf>, %4, %cst_6 [1] : vector<8x40xf32> to vector<8xf32>
    %6 = vector.shape_cast %5 : vector<8xf32> to vector<8x1xf32>
    %7 = vector.broadcast %6 : vector<8x1xf32> to vector<8x40xf32>
    %8 = arith.subf %4, %7 : vector<8x40xf32>
    %9 = math.exp %8 : vector<8x40xf32>
    %c0_7 = arith.constant 0 : index
    %c0_8 = arith.constant 0 : index
    %10 = vector.load %arg4[%c0_7, %c0_8] : memref<40x128xf32, #tpu.memory_space<vmem>>, vector<40x128xf32>
    %cst_9 = arith.constant dense<0.000000e+00> : vector<8x128xf32>
    %11 = tpu.matmul %9, %10, %cst_9 {dimension_numbers = #tpu.dot_dimension_numbers<[1], [0], [0], [1], [0, 0, 1, 1], [], []>} : vector<8x40xf32>, vector<40x128xf32>, vector<8x128xf32> -> vector<8x128xf32>
    %c0_10 = arith.constant 0 : index
    %c0_11 = arith.constant 0 : index
    %12 = vector.load %arg5[%c0_10, %c0_11] : memref<40x128xf32, #tpu.memory_space<vmem>>, vector<40x128xf32>
    %cst_12 = arith.constant dense<0.000000e+00> : vector<8x128xf32>
    %13 = tpu.matmul %9, %12, %cst_12 {dimension_numbers = #tpu.dot_dimension_numbers<[1], [0], [0], [1], [0, 0, 1, 1], [], []>} : vector<8x40xf32>, vector<40x128xf32>, vector<8x128xf32> -> vector<8x128xf32>
    %14 = tpu.reciprocal %13 {approx = true} : vector<8x128xf32> -> vector<8x128xf32>
    %15 = arith.mulf %11, %14 : vector<8x128xf32>
    %c0_13 = arith.constant 0 : index
    %c0_14 = arith.constant 0 : index
    %16 = vector.load %arg6[%c0_13, %c0_14] : memref<8x128xf32, #tpu.memory_space<vmem>>, vector<8x128xf32>
    tpu.vector_store %arg6[%c0_13, %c0_14], %15 {strides = array<i32>} : memref<8x128xf32, #tpu.memory_space<vmem>>, vector<8x128xf32>,
    return
  }
  func.func @transform_0(%arg0: i32) -> (i32, i32) {
    %c0_i32 = arith.constant 0 : i32
    %c0_i32_0 = arith.constant 0 : i32
    return %arg0, %c0_i32 : i32, i32
  }
  func.func @transform_1(%arg0: i32) -> (i32, i32) {
    %c0_i32 = arith.constant 0 : i32
    %c0_i32_0 = arith.constant 0 : i32
    %c0_i32_1 = arith.constant 0 : i32
    return %c0_i32, %c0_i32_0 : i32, i32
  }
  func.func @transform_2(%arg0: i32) -> (i32, i32) {
    %c0_i32 = arith.constant 0 : i32
    %c0_i32_0 = arith.constant 0 : i32
    %c0_i32_1 = arith.constant 0 : i32
    return %c0_i32, %c0_i32_0 : i32, i32
  }
  func.func @transform_3(%arg0: i32) -> (i32, i32) {
    %c0_i32 = arith.constant 0 : i32
    %c0_i32_0 = arith.constant 0 : i32
    %c0_i32_1 = arith.constant 0 : i32
    return %c0_i32, %c0_i32_0 : i32, i32
  }
  func.func @transform_4(%arg0: i32) -> (i32, i32) {
    %c0_i32 = arith.constant 0 : i32
    %c0_i32_0 = arith.constant 0 : i32
    %c0_i32_1 = arith.constant 0 : i32
    return %c0_i32, %c0_i32_0 : i32, i32
  }
  func.func @transform_5(%arg0: i32) -> (i32, i32) {
    %c0_i32 = arith.constant 0 : i32
    %c0_i32_0 = arith.constant 0 : i32
    return %arg0, %c0_i32 : i32, i32
  }
}

</mosaic_0001>

<llo_original>
// kernel: tpu_custom_call.1
$region0: #{tpu_custom_call.1}
  #allocation0 [shape = 'u32[]', space=smem, size = 0x4, offset = 0x4, fixed_abs, tag = 'smem constant byte address 0x4 - core index']
  #allocation1 [shape = 'u32[144,128]{1,0:T(1,128)}', space=vmem, size = 0x12000, scoped, tag = 'internal scratch']
  %s0 = inlined_call_operand.hbm [shape: f32[16,128], index: 0, kind: input, shape index: {}]
  %s1 = inlined_call_operand.vmem [shape: f32[128,128], index: 1, kind: input, shape index: {}]
  %s2 = inlined_call_operand.vmem [shape: f32[128,40], index: 2, kind: input, shape index: {}]
  %s3 = inlined_call_operand.vmem [shape: f32[40,128], index: 3, kind: input, shape index: {}]
  %s4 = inlined_call_operand.hbm [shape: f32[40,128], index: 4, kind: input, shape index: {}]
  %s5 = inlined_call_operand.hbm [shape: f32[16,128], index: 5, kind: output, shape index: {}]
  %s6 = sld [smem:[#allocation0]]
  $region61: #{tpu_custom_call.1} parent=0
    _
  %s8 = ssub.s32 1, %s6
  %s9 = scalar_select 0, %s8, %s6
  $region1: #{tpu_custom_call.1} parent=0
    #allocation2 [shape = 'u8[8192]{0}', space=vmem, size = 0x2000, scoped, tag = 'input window, operand 0']
    #allocation3 [shape = 's32[2]{0}', space=sflag, size = 0x8, scoped, tag = 'scoped memory for tpu_custom_call.1']
    #allocation4 [shape = 's32[2]{0}', space=sflag, size = 0x8, scoped, tag = 'scoped memory for tpu_custom_call.1']
    #allocation5 [shape = 'u8[20480]{0}', space=vmem, size = 0x5000, scoped, tag = 'input window, operand 4, single buffered']
    #allocation6 [shape = 's32[1]{0}', space=sflag, size = 0x4, scoped, tag = 'scoped memory for tpu_custom_call.1']
    #allocation7 [shape = 'u8[8192]{0}', space=vmem, size = 0x2000, scoped, tag = 'output window, operand 0']
    %10 = vsyncpa [#allocation3], 0
    %s11 = scalar_lea.sflag [#allocation3], 1
    %12 = vsyncpa %s11, 0
    %13 = vsyncpa [#allocation6], 0
    %14 = vsyncpa [#allocation4], 0
    %s15 = scalar_lea.sflag [#allocation4], 1
    %16 = vsyncpa %s15, 0
    loop: start=0, step=1, limit=4
    $region2: #{tpu_custom_call.1} parent=1 // loop_pre_header
      _
    $region3: #{tpu_custom_call.1} parent=1 // loop_header
      %s18 = sphi 0, %s22
      %p19 = scmp.ge.s32.totalorder %s18, 4
      %s28 = sphi 0, %s30
      %s31 = sphi 0, %s28
      %s32 = sphi 0, %s31
      %s48 = sphi 0, %s32
      %s52 = sphi 0, %s52
      %s54 = sphi 0, %s52
      %s55 = sphi 0, %s54
      %s69 = sphi 0, %s55
      %s73 = sphi 0, %s73
      %s75 = sphi 0, %s73
      %s76 = sphi 0, %s75
      %s90 = sphi 0, %s76
      %s94 = sphi 0, %s94
      %s96 = sphi 0, %s94
      %s97 = sphi 0, %s96
      %s111 = sphi 0, %s97
      %s115 = sphi 0, %s115
      %s117 = sphi 0, %s115
      %s118 = sphi 0, %s117
      %s132 = sphi 0, %s118
      %s138 = sphi 0, %s140
      %s141 = sphi 0, %s138
      %s142 = sphi 0, %s141
      %s158 = sphi 0, %s142
    $region4: #{tpu_custom_call.1} parent=1 // loop_header_branch
      %21 = sbr.rel (%p19) target = $region8
    $region5: #{tpu_custom_call.1} parent=1 // loop_body
      %s23 = ssub.s32 %s18, 1
      %s24 = ssub.s32 %s18, 2
      %s25 = sadd.s32 %s18, 1
      %s26 = ssub.s32 %s18, %s25
      %p27 = scmp.eq.s32.totalorder %s26, 0
      %s29 = sadd.s32 %s28, 1
      %s30 = scalar_select %p27, %s28, %s29
      %p33 = pneg %p27
      %p34 = scmp.eq.s32.totalorder %s18, 1
      %p35 = por %p33, %p34
      %p36 = scmp.ne.s32.totalorder %s28, %s31
      %p37 = scmp.eq.s32.totalorder %s18, 0
      %p38 = por %p36, %p37
      %p39 = scmp.ne.s32.totalorder %s28, %s31
      %p40 = scmp.eq.s32.totalorder %s23, 1
      %p41 = por %p39, %p40
      %p42 = scmp.ne.s32.totalorder %s31, %s32
      %p43 = scmp.eq.s32.totalorder %s23, 0
      %p44 = por %p42, %p43
      %p45 = scmp.ne.s32.totalorder %s31, %s32
      %p46 = scmp.eq.s32.totalorder %s24, 1
      %p47 = por %p45, %p46
      %p49 = scmp.ne.s32.totalorder %s32, %s48
      %p50 = scmp.eq.s32.totalorder %s24, 0
      %p51 = por %p49, %p50
      %s53 = sadd.s32 %s52, 1
      %p56 = scmp.eq.s32.totalorder %s18, 1
      %p57 = scmp.ne.s32.totalorder %s52, %s54
      %p58 = scmp.eq.s32.totalorder %s18, 0
      %p59 = por %p57, %p58
      %p60 = scmp.ne.s32.totalorder %s52, %s54
      %p61 = scmp.eq.s32.totalorder %s23, 1
      %p62 = por %p60, %p61
      %p63 = scmp.ne.s32.totalorder %s54, %s55
      %p64 = scmp.eq.s32.totalorder %s23, 0
      %p65 = por %p63, %p64
      %p66 = scmp.ne.s32.totalorder %s54, %s55
      %p67 = scmp.eq.s32.totalorder %s24, 1
      %p68 = por %p66, %p67
      %p70 = scmp.ne.s32.totalorder %s55, %s69
      %p71 = scmp.eq.s32.totalorder %s24, 0
      %p72 = por %p70, %p71
      %s74 = sadd.s32 %s73, 1
      %p77 = scmp.eq.s32.totalorder %s18, 1
      %p78 = scmp.ne.s32.totalorder %s73, %s75
      %p79 = scmp.eq.s32.totalorder %s18, 0
      %p80 = por %p78, %p79
      %p81 = scmp.ne.s32.totalorder %s73, %s75
      %p82 = scmp.eq.s32.totalorder %s23, 1
      %p83 = por %p81, %p82
      %p84 = scmp.ne.s32.totalorder %s75, %s76
      %p85 = scmp.eq.s32.totalorder %s23, 0
      %p86 = por %p84, %p85
      %p87 = scmp.ne.s32.totalorder %s75, %s76
      %p88 = scmp.eq.s32.totalorder %s24, 1
      %p89 = por %p87, %p88
      %p91 = scmp.ne.s32.totalorder %s76, %s90
      %p92 = scmp.eq.s32.totalorder %s24, 0
      %p93 = por %p91, %p92
      %s95 = sadd.s32 %s94, 1
      %p98 = scmp.eq.s32.totalorder %s18, 1
      %p99 = scmp.ne.s32.totalorder %s94, %s96
      %p100 = scmp.eq.s32.totalorder %s18, 0
      %p101 = por %p99, %p100
      %p102 = scmp.ne.s32.totalorder %s94, %s96
      %p103 = scmp.eq.s32.totalorder %s23, 1
      %p104 = por %p102, %p103
      %p105 = scmp.ne.s32.totalorder %s96, %s97
      %p106 = scmp.eq.s32.totalorder %s23, 0
      %p107 = por %p105, %p106
      %p108 = scmp.ne.s32.totalorder %s96, %s97
      %p109 = scmp.eq.s32.totalorder %s24, 1
      %p110 = por %p108, %p109
      %p112 = scmp.ne.s32.totalorder %s97, %s111
      %p113 = scmp.eq.s32.totalorder %s24, 0
      %p114 = por %p112, %p113
      %s116 = sadd.s32 %s115, 1
      %p119 = scmp.eq.s32.totalorder %s18, 1
      %p120 = scmp.ne.s32.totalorder %s115, %s117
      %p121 = scmp.eq.s32.totalorder %s18, 0
      %p122 = por %p120, %p121
      %p123 = scmp.ne.s32.totalorder %s115, %s117
      %p124 = scmp.eq.s32.totalorder %s23, 1
      %p125 = por %p123, %p124
      %p126 = scmp.ne.s32.totalorder %s117, %s118
      %p127 = scmp.eq.s32.totalorder %s23, 0
      %p128 = por %p126, %p127
      %p129 = scmp.ne.s32.totalorder %s117, %s118
      %p130 = scmp.eq.s32.totalorder %s24, 1
      %p131 = por %p129, %p130
      %p133 = scmp.ne.s32.totalorder %s118, %s132
      %p134 = scmp.eq.s32.totalorder %s24, 0
      %p135 = por %p133, %p134
      %s136 = ssub.s32 %s18, %s25
      %p137 = scmp.eq.s32.totalorder %s136, 0
      %s139 = sadd.s32 %s138, 1
      %s140 = scalar_select %p137, %s138, %s139
      %p143 = pneg %p137
      %p144 = scmp.eq.s32.totalorder %s18, 1
      %p145 = por %p143, %p144
      %p146 = scmp.ne.s32.totalorder %s138, %s141
      %p147 = scmp.eq.s32.totalorder %s18, 0
      %p148 = por %p146, %p147
      %p149 = scmp.ne.s32.totalorder %s138, %s141
      %p150 = scmp.eq.s32.totalorder %s23, 1
      %p151 = por %p149, %p150
      %p152 = scmp.ne.s32.totalorder %s141, %s142
      %p153 = scmp.eq.s32.totalorder %s23, 0
      %p154 = por %p152, %p153
      %p155 = scmp.ne.s32.totalorder %s141, %s142
      %p156 = scmp.eq.s32.totalorder %s24, 1
      %p157 = por %p155, %p156
      %p159 = scmp.ne.s32.totalorder %s142, %s158
      %p160 = scmp.eq.s32.totalorder %s24, 0
      %p161 = por %p159, %p160
      %p162 = scmp.le.s32.totalorder 1, %s18
      %p163 = scmp.lt.s32.totalorder %s18, 3
      %p164 = pnand %p162, %p163
      %p165 = pneg %p164
      // Predicated region
      $region9: #{tpu_custom_call.1} parent=5 // pred_check
        _
      $region10: #{tpu_custom_call.1} parent=5 // pred_check_branch
        %167 = sbr.rel (%p164) target = $region12
      $region11: #{tpu_custom_call.1} parent=5 // pred_region
        %s168 = ssub.s32 %s18, 1
        // Predicated region
        $region13: #{tpu_custom_call.1} parent=11 // pred_check
          %p169 = pneg %p65
        $region14: #{tpu_custom_call.1} parent=11 // pred_check_branch
          %171 = sbr.rel (%p169) target = $region16
        $region15: #{tpu_custom_call.1} parent=11 // pred_region
          _
        $region16: #{tpu_custom_call.1} parent=11 // pred_fallthru
          _
        // Predicated region
        $region17: #{tpu_custom_call.1} parent=11 // pred_check
          %p172 = pneg %p86
        $region18: #{tpu_custom_call.1} parent=11 // pred_check_branch
          %174 = sbr.rel (%p172) target = $region20
        $region19: #{tpu_custom_call.1} parent=11 // pred_region
          _
        $region20: #{tpu_custom_call.1} parent=11 // pred_fallthru
          _
        // Predicated region
        $region21: #{tpu_custom_call.1} parent=11 // pred_check
          %p175 = pneg %p107
        $region22: #{tpu_custom_call.1} parent=11 // pred_check_branch
          %177 = sbr.rel (%p175) target = $region24
        $region23: #{tpu_custom_call.1} parent=11 // pred_region
          _
        $region24: #{tpu_custom_call.1} parent=11 // pred_fallthru
          _
        // Predicated region
        $region25: #{tpu_custom_call.1} parent=11 // pred_check
          %p178 = pneg %p128
        $region26: #{tpu_custom_call.1} parent=11 // pred_check_branch
          %180 = sbr.rel (%p178) target = $region28
        $region27: #{tpu_custom_call.1} parent=11 // pred_region
          %s182 = ssub.s32 640, 640
          %183 = vsyncadd [#allocation6], %s182
          %s184 = sshll.u32 [#allocation5], 4
          %s185 = int_to_ptr.vmem [resolvable:$true] %s184
          %190 = dma.hbm_to_vmem [thread:$0]  %s4, 640, %s185, [#allocation6], 128, 128, 8
        $region28: #{tpu_custom_call.1} parent=11 // pred_fallthru
          _
      $region12: #{tpu_custom_call.1} parent=5 // pred_fallthru
        _
      %p191 = scmp.lt.s32.totalorder %s18, 2
      // Predicated region
      $region29: #{tpu_custom_call.1} parent=5 // pred_check
        %p192 = pneg %p191
      $region30: #{tpu_custom_call.1} parent=5 // pred_check_branch
        %194 = sbr.rel (%p192) target = $region32
      $region31: #{tpu_custom_call.1} parent=5 // pred_region
        // Predicated region
        $region33: #{tpu_custom_call.1} parent=31 // pred_check
          %p195 = pneg %p38
        $region34: #{tpu_custom_call.1} parent=31 // pred_check_branch
          %197 = sbr.rel (%p195) target = $region36
        $region35: #{tpu_custom_call.1} parent=31 // pred_region
          %s198 = sand.u32 %s28, 1
          %s199 = scalar_lea.sflag [#allocation3], %s198
          %s200 = sand.u32 %s28, 1
          %s201 = smul.addr %s200, 8
          %s202 = scalar_lea.vmem [#allocation2], %s201
          %s204 = ssub.s32 128, 128
          %205 = vsyncadd %s199, %s204
          %s206 = smul.addr %s18, 128
          %s207 = scalar_lea.hbm %s0, %s206
          %s209 = sshll.u32 %s202, 4
          %s210 = int_to_ptr.vmem [resolvable:$true] %s209
          %212 = dma.hbm_to_vmem [thread:$0]  %s207, 128, %s210, %s199
        $region36: #{tpu_custom_call.1} parent=31 // pred_fallthru
          _
      $region32: #{tpu_custom_call.1} parent=5 // pred_fallthru
        _
      %p213 = scmp.le.s32.totalorder 1, %s18
      %p214 = scmp.lt.s32.totalorder %s18, 3
      %p215 = pnand %p213, %p214
      %p216 = pneg %p215
      // Predicated region
      $region37: #{tpu_custom_call.1} parent=5 // pred_check
        _
      $region38: #{tpu_custom_call.1} parent=5 // pred_check_branch
        %218 = sbr.rel (%p215) target = $region40
      $region39: #{tpu_custom_call.1} parent=5 // pred_region
        %s219 = ssub.s32 %s18, 1
        %s220 = sand.u32 %s31, 1
        %s221 = scalar_lea.sflag [#allocation3], %s220
        %s222 = sand.u32 %s31, 1
        %s223 = smul.addr %s222, 8
        %s224 = scalar_lea.vmem [#allocation2], %s223
        // Predicated region
        $region41: #{tpu_custom_call.1} parent=39 // pred_check
          %p225 = pneg %p44
        $region42: #{tpu_custom_call.1} parent=39 // pred_check_branch
          %227 = sbr.rel (%p225) target = $region44
        $region43: #{tpu_custom_call.1} parent=39 // pred_region
          %228 = dma.done %s221, 128
        $region44: #{tpu_custom_call.1} parent=39 // pred_fallthru
          _
        // Predicated region
        $region45: #{tpu_custom_call.1} parent=39 // pred_check
          %p229 = pneg %p128
        $region46: #{tpu_custom_call.1} parent=39 // pred_check_branch
          %231 = sbr.rel (%p229) target = $region48
        $region47: #{tpu_custom_call.1} parent=39 // pred_region
          %232 = dma.done [#allocation6], 640
        $region48: #{tpu_custom_call.1} parent=39 // pred_fallthru
          _
        %s233 = sand.u32 %s31, 1
        %s234 = scalar_lea.sflag [#allocation3], %s233
        %s235 = sand.u32 %s31, 1
        %s236 = smul.addr %s235, 8
        %s237 = scalar_lea.vmem [#allocation2], %s236
        %p238 = pneg %p44
        %p239 = pneg %p41
        %p240 = pneg %p65
        %p241 = pneg %p62
        %p242 = pneg %p86
        %p243 = pneg %p83
        %p244 = pneg %p107
        %p245 = pneg %p104
        %p246 = pneg %p128
        %p247 = pneg %p125
        %p248 = pneg %p154
        %p249 = pneg %p151
        %s250 = sand.u32 %s141, 1
        %s251 = scalar_lea.sflag [#allocation4], %s250
        %s252 = sand.u32 %s141, 1
        %s253 = smul.addr %s252, 8
        %s254 = scalar_lea.vmem [#allocation7], %s253
        %v255 = vld [vmem:[%s224] sm:$0xff]
        %v256 = vld [vmem:[%s1] sm:$0xff]
        %v257 = vld [vmem:[%s1 + $0x8] sm:$0xff]
        %v258 = vld [vmem:[%s1 + $0x10] sm:$0xff]
        %v259 = vld [vmem:[%s1 + $0x18] sm:$0xff]
        %v260 = vld [vmem:[%s1 + $0x20] sm:$0xff]
        %v261 = vld [vmem:[%s1 + $0x28] sm:$0xff]
        %v262 = vld [vmem:[%s1 + $0x30] sm:$0xff]
        %v263 = vld [vmem:[%s1 + $0x38] sm:$0xff]
        %v264 = vld [vmem:[%s1 + $0x40] sm:$0xff]
        %v265 = vld [vmem:[%s1 + $0x48] sm:$0xff]
        %v266 = vld [vmem:[%s1 + $0x50] sm:$0xff]
        %v267 = vld [vmem:[%s1 + $0x58] sm:$0xff]
        %v268 = vld [vmem:[%s1 + $0x60] sm:$0xff]
        %v269 = vld [vmem:[%s1 + $0x68] sm:$0xff]
        %v270 = vld [vmem:[%s1 + $0x70] sm:$0xff]
        %v271 = vld [vmem:[%s1 + $0x78] sm:$0xff]
        %272 = vmatprep.subr.mxu0 0.0
        %273 = vmatpush1.msra.mxu0 %v271
        %274 = vmatprep.subr.mxu0 0.0
        %275 = vmatpush1.msra.mxu0 %v270
        %276 = vmatprep.subr.mxu0 0.0
        %277 = vmatpush1.msra.mxu0 %v269
        %278 = vmatprep.subr.mxu0 0.0
        %279 = vmatpush1.msra.mxu0 %v268
        %280 = vmatprep.subr.mxu0 0.0
        %281 = vmatpush1.msra.mxu0 %v267
        %282 = vmatprep.subr.mxu0 0.0
        %283 = vmatpush1.msra.mxu0 %v266
        %284 = vmatprep.subr.mxu0 0.0
        %285 = vmatpush1.msra.mxu0 %v265
        %286 = vmatprep.subr.mxu0 0.0
        %287 = vmatpush1.msra.mxu0 %v264
        %288 = vmatprep.subr.mxu0 0.0
        %289 = vmatpush1.msra.mxu0 %v263
        %290 = vmatprep.subr.mxu0 0.0
        %291 = vmatpush1.msra.mxu0 %v262
        %292 = vmatprep.subr.mxu0 0.0
        %293 = vmatpush1.msra.mxu0 %v261
        %294 = vmatprep.subr.mxu0 0.0
        %295 = vmatpush1.msra.mxu0 %v260
        %296 = vmatprep.subr.mxu0 0.0
        %297 = vmatpush1.msra.mxu0 %v259
        %298 = vmatprep.subr.mxu0 0.0
        %299 = vmatpush1.msra.mxu0 %v258
        %300 = vmatprep.subr.mxu0 0.0
        %301 = vmatpush1.msra.mxu0 %v257
        %302 = vmatprep.subr.mxu0 0.0
        %303 = vmatpush1.msra.mxu0 %v256
        %304 = vmatprep.subr.mxu0 0.0
        %305 = vmatpush2.msra.mxu0 0.0
        %306 = vmatprep.subr.mxu0 0.0
        %307 = vmatpush2.msra.mxu0 0.0
        %308 = vmatprep.subr.mxu0 0.0
        %309 = vmatpush2.msra.mxu0 0.0
        %310 = vmatprep.subr.mxu0 0.0
        %311 = vmatpush2.msra.mxu0 0.0
        %312 = vmatprep.subr.mxu0 0.0
        %313 = vmatpush2.msra.mxu0 0.0
        %314 = vmatprep.subr.mxu0 0.0
        %315 = vmatpush2.msra.mxu0 0.0
        %316 = vmatprep.subr.mxu0 0.0
        %317 = vmatpush2.msra.mxu0 0.0
        %318 = vmatprep.subr.mxu0 0.0
        %319 = vmatpush2.msra.mxu0 0.0
        %320 = vmatprep.subr.mxu0 0.0
        %321 = vmatpush2.msra.mxu0 0.0
        %322 = vmatprep.subr.mxu0 0.0
        %323 = vmatpush2.msra.mxu0 0.0
        %324 = vmatprep.subr.mxu0 0.0
        %325 = vmatpush2.msra.mxu0 0.0
        %326 = vmatprep.subr.mxu0 0.0
        %327 = vmatpush2.msra.mxu0 0.0
        %328 = vmatprep.subr.mxu0 0.0
        %329 = vmatpush2.msra.mxu0 0.0
        %330 = vmatprep.subr.mxu0 0.0
        %331 = vmatpush2.msra.mxu0 0.0
        %332 = vmatprep.subr.mxu0 0.0
        %333 = vmatpush2.msra.mxu0 0.0
        %334 = vmatprep.subr.mxu0 0.0
        %335 = vmatpush2.msra.mxu0 0.0
        %336 = vmatprep.mubr.f32.mxu0 0.0
        %337 = vmatmul.mubr.f32.gmra.mxu0 %v255
        %v338 = vpop.f32.mrf.mxu0
        %v339 = vadd.f32 0.0, %v338
        %v340 = vpop.f32.mrf.mxu0
        %341 = vdwg.mxu0
        %v342 = vld [vmem:[%s2] sm:$0xff]
        %v343 = vld [vmem:[%s2 + $0x8] sm:$0xff]
        %v344 = vld [vmem:[%s2 + $0x10] sm:$0xff]
        %v345 = vld [vmem:[%s2 + $0x18] sm:$0xff]
        %v346 = vld [vmem:[%s2 + $0x20] sm:$0xff]
        %v347 = vld [vmem:[%s2 + $0x28] sm:$0xff]
        %v348 = vld [vmem:[%s2 + $0x30] sm:$0xff]
        %v349 = vld [vmem:[%s2 + $0x38] sm:$0xff]
        %v350 = vld [vmem:[%s2 + $0x40] sm:$0xff]
        %v351 = vld [vmem:[%s2 + $0x48] sm:$0xff]
        %v352 = vld [vmem:[%s2 + $0x50] sm:$0xff]
        %v353 = vld [vmem:[%s2 + $0x58] sm:$0xff]
        %v354 = vld [vmem:[%s2 + $0x60] sm:$0xff]
        %v355 = vld [vmem:[%s2 + $0x68] sm:$0xff]
        %v356 = vld [vmem:[%s2 + $0x70] sm:$0xff]
        %v357 = vld [vmem:[%s2 + $0x78] sm:$0xff]
        %358 = vmatprep.subr.mxu0 0.0
        %359 = vmatpush1.msra.mxu0 %v357
        %360 = vmatprep.subr.mxu0 0.0
        %361 = vmatpush1.msra.mxu0 %v356
        %362 = vmatprep.subr.mxu0 0.0
        %363 = vmatpush1.msra.mxu0 %v355
        %364 = vmatprep.subr.mxu0 0.0
        %365 = vmatpush1.msra.mxu0 %v354
        %366 = vmatprep.subr.mxu0 0.0
        %367 = vmatpush1.msra.mxu0 %v353
        %368 = vmatprep.subr.mxu0 0.0
        %369 = vmatpush1.msra.mxu0 %v352
        %370 = vmatprep.subr.mxu0 0.0
        %371 = vmatpush1.msra.mxu0 %v351
        %372 = vmatprep.subr.mxu0 0.0
        %373 = vmatpush1.msra.mxu0 %v350
        %374 = vmatprep.subr.mxu0 0.0
        %375 = vmatpush1.msra.mxu0 %v349
        %376 = vmatprep.subr.mxu0 0.0
        %377 = vmatpush1.msra.mxu0 %v348
        %378 = vmatprep.subr.mxu0 0.0
        %379 = vmatpush1.msra.mxu0 %v347
        %380 = vmatprep.subr.mxu0 0.0
        %381 = vmatpush1.msra.mxu0 %v346
        %382 = vmatprep.subr.mxu0 0.0
        %383 = vmatpush1.msra.mxu0 %v345
        %384 = vmatprep.subr.mxu0 0.0
        %385 = vmatpush1.msra.mxu0 %v344
        %386 = vmatprep.subr.mxu0 0.0
        %387 = vmatpush1.msra.mxu0 %v343
        %388 = vmatprep.subr.mxu0 0.0
        %389 = vmatpush1.msra.mxu0 %v342
        %390 = vmatprep.subr.mxu0 0.0
        %391 = vmatpush2.msra.mxu0 0.0
        %392 = vmatprep.subr.mxu0 0.0
        %393 = vmatpush2.msra.mxu0 0.0
        %394 = vmatprep.subr.mxu0 0.0
        %395 = vmatpush2.msra.mxu0 0.0
        %396 = vmatprep.subr.mxu0 0.0
        %397 = vmatpush2.msra.mxu0 0.0
        %398 = vmatprep.subr.mxu0 0.0
        %399 = vmatpush2.msra.mxu0 0.0
        %400 = vmatprep.subr.mxu0 0.0
        %401 = vmatpush2.msra.mxu0 0.0
        %402 = vmatprep.subr.mxu0 0.0
        %403 = vmatpush2.msra.mxu0 0.0
        %404 = vmatprep.subr.mxu0 0.0
        %405 = vmatpush2.msra.mxu0 0.0
        %406 = vmatprep.subr.mxu0 0.0
        %407 = vmatpush2.msra.mxu0 0.0
        %408 = vmatprep.subr.mxu0 0.0
        %409 = vmatpush2.msra.mxu0 0.0
        %410 = vmatprep.subr.mxu0 0.0
        %411 = vmatpush2.msra.mxu0 0.0
        %412 = vmatprep.subr.mxu0 0.0
        %413 = vmatpush2.msra.mxu0 0.0
        %414 = vmatprep.subr.mxu0 0.0
        %415 = vmatpush2.msra.mxu0 0.0
        %416 = vmatprep.subr.mxu0 0.0
        %417 = vmatpush2.msra.mxu0 0.0
        %418 = vmatprep.subr.mxu0 0.0
        %419 = vmatpush2.msra.mxu0 0.0
        %420 = vmatprep.subr.mxu0 0.0
        %421 = vmatpush2.msra.mxu0 0.0
        %422 = vmatprep.mubr.f32.mxu0 0.0
        %423 = vmatmul.mubr.f32.gmra.mxu0 %v339
        %v424 = vpop.f32.mrf.mxu0
        %v425 = vadd.f32 0.0, %v424
        %v426 = vpop.f32.mrf.mxu0
        %427 = vdwg.mxu0
        %vm428 = vcmask 326656
        %v429 = vsel %vm428, %v425, -inf
        %430 = vmax.xlane.f32.xlu0 %v429
        %v431 = vpop.xlane.xlu0 %430
        %v432 = vsub.f32 %v425, %v431
        %v433 = vmul.f32 %v432, 1.442695
        %v434 = vpow.pop %v433
        %v435 = vld [vmem:[%s3] sm:$0xff]
        %v436 = vld [vmem:[%s3 + $0x8] sm:$0xff]
        %v437 = vld [vmem:[%s3 + $0x10] sm:$0xff]
        %v438 = vld [vmem:[%s3 + $0x18] sm:$0xff]
        %v439 = vld [vmem:[%s3 + $0x20] sm:$0xff]
        %v441 = vsel %vm428, %v434, 0
        %443 = vmatprep.subr.mxu0 0.0
        %444 = vmatpush1.msra.mxu0 0.0
        %445 = vmatprep.subr.mxu0 0.0
        %446 = vmatpush1.msra.mxu0 0.0
        %447 = vmatprep.subr.mxu0 0.0
        %448 = vmatpush1.msra.mxu0 0.0
        %449 = vmatprep.subr.mxu0 0.0
        %450 = vmatpush1.msra.mxu0 0.0
        %451 = vmatprep.subr.mxu0 0.0
        %452 = vmatpush1.msra.mxu0 0.0
        %453 = vmatprep.subr.mxu0 0.0
        %454 = vmatpush1.msra.mxu0 0.0
        %455 = vmatprep.subr.mxu0 0.0
        %456 = vmatpush1.msra.mxu0 0.0
        %457 = vmatprep.subr.mxu0 0.0
        %458 = vmatpush1.msra.mxu0 0.0
        %459 = vmatprep.subr.mxu0 0.0
        %460 = vmatpush1.msra.mxu0 0.0
        %461 = vmatprep.subr.mxu0 0.0
        %462 = vmatpush1.msra.mxu0 0.0
        %463 = vmatprep.subr.mxu0 0.0
        %464 = vmatpush1.msra.mxu0 0.0
        %465 = vmatprep.subr.mxu0 0.0
        %466 = vmatpush1.msra.mxu0 %v439
        %467 = vmatprep.subr.mxu0 0.0
        %468 = vmatpush1.msra.mxu0 %v438
        %469 = vmatprep.subr.mxu0 0.0
        %470 = vmatpush1.msra.mxu0 %v437
        %471 = vmatprep.subr.mxu0 0.0
        %472 = vmatpush1.msra.mxu0 %v436
        %473 = vmatprep.subr.mxu0 0.0
        %474 = vmatpush1.msra.mxu0 %v435
        %475 = vmatprep.subr.mxu0 0.0
        %476 = vmatpush2.msra.mxu0 0.0
        %477 = vmatprep.subr.mxu0 0.0
        %478 = vmatpush2.msra.mxu0 0.0
        %479 = vmatprep.subr.mxu0 0.0
        %480 = vmatpush2.msra.mxu0 0.0
        %481 = vmatprep.subr.mxu0 0.0
        %482 = vmatpush2.msra.mxu0 0.0
        %483 = vmatprep.subr.mxu0 0.0
        %484 = vmatpush2.msra.mxu0 0.0
        %485 = vmatprep.subr.mxu0 0.0
        %486 = vmatpush2.msra.mxu0 0.0
        %487 = vmatprep.subr.mxu0 0.0
        %488 = vmatpush2.msra.mxu0 0.0
        %489 = vmatprep.subr.mxu0 0.0
        %490 = vmatpush2.msra.mxu0 0.0
        %491 = vmatprep.subr.mxu0 0.0
        %492 = vmatpush2.msra.mxu0 0.0
        %493 = vmatprep.subr.mxu0 0.0
        %494 = vmatpush2.msra.mxu0 0.0
        %495 = vmatprep.subr.mxu0 0.0
        %496 = vmatpush2.msra.mxu0 0.0
        %497 = vmatprep.subr.mxu0 0.0
        %498 = vmatpush2.msra.mxu0 0.0
        %499 = vmatprep.subr.mxu0 0.0
        %500 = vmatpush2.msra.mxu0 0.0
        %501 = vmatprep.subr.mxu0 0.0
        %502 = vmatpush2.msra.mxu0 0.0
        %503 = vmatprep.subr.mxu0 0.0
        %504 = vmatpush2.msra.mxu0 0.0
        %505 = vmatprep.subr.mxu0 0.0
        %506 = vmatpush2.msra.mxu0 0.0
        %507 = vmatprep.mubr.f32.mxu0 0.0
        %508 = vmatmul.mubr.f32.gmra.mxu0 %v441
        %v509 = vpop.f32.mrf.mxu0
        %v510 = vadd.f32 0.0, %v509
        %v511 = vpop.f32.mrf.mxu0
        %512 = vdwg.mxu0
        %v513 = vld [vmem:[#allocation5] sm:$0xff]
        %v514 = vld [vmem:[#allocation5 + $0x8] sm:$0xff]
        %v515 = vld [vmem:[#allocation5 + $0x10] sm:$0xff]
        %v516 = vld [vmem:[#allocation5 + $0x18] sm:$0xff]
        %v517 = vld [vmem:[#allocation5 + $0x20] sm:$0xff]
        %518 = vmatprep.subr.mxu0 0.0
        %519 = vmatpush1.msra.mxu0 0.0
        %520 = vmatprep.subr.mxu0 0.0
        %521 = vmatpush1.msra.mxu0 0.0
        %522 = vmatprep.subr.mxu0 0.0
        %523 = vmatpush1.msra.mxu0 0.0
        %524 = vmatprep.subr.mxu0 0.0
        %525 = vmatpush1.msra.mxu0 0.0
        %526 = vmatprep.subr.mxu0 0.0
        %527 = vmatpush1.msra.mxu0 0.0
        %528 = vmatprep.subr.mxu0 0.0
        %529 = vmatpush1.msra.mxu0 0.0
        %530 = vmatprep.subr.mxu0 0.0
        %531 = vmatpush1.msra.mxu0 0.0
        %532 = vmatprep.subr.mxu0 0.0
        %533 = vmatpush1.msra.mxu0 0.0
        %534 = vmatprep.subr.mxu0 0.0
        %535 = vmatpush1.msra.mxu0 0.0
        %536 = vmatprep.subr.mxu0 0.0
        %537 = vmatpush1.msra.mxu0 0.0
        %538 = vmatprep.subr.mxu0 0.0
        %539 = vmatpush1.msra.mxu0 0.0
        %540 = vmatprep.subr.mxu0 0.0
        %541 = vmatpush1.msra.mxu0 %v517
        %542 = vmatprep.subr.mxu0 0.0
        %543 = vmatpush1.msra.mxu0 %v516
        %544 = vmatprep.subr.mxu0 0.0
        %545 = vmatpush1.msra.mxu0 %v515
        %546 = vmatprep.subr.mxu0 0.0
        %547 = vmatpush1.msra.mxu0 %v514
        %548 = vmatprep.subr.mxu0 0.0
        %549 = vmatpush1.msra.mxu0 %v513
        %550 = vmatprep.subr.mxu0 0.0
        %551 = vmatpush2.msra.mxu0 0.0
        %552 = vmatprep.subr.mxu0 0.0
        %553 = vmatpush2.msra.mxu0 0.0
        %554 = vmatprep.subr.mxu0 0.0
        %555 = vmatpush2.msra.mxu0 0.0
        %556 = vmatprep.subr.mxu0 0.0
        %557 = vmatpush2.msra.mxu0 0.0
        %558 = vmatprep.subr.mxu0 0.0
        %559 = vmatpush2.msra.mxu0 0.0
        %560 = vmatprep.subr.mxu0 0.0
        %561 = vmatpush2.msra.mxu0 0.0
        %562 = vmatprep.subr.mxu0 0.0
        %563 = vmatpush2.msra.mxu0 0.0
        %564 = vmatprep.subr.mxu0 0.0
        %565 = vmatpush2.msra.mxu0 0.0
        %566 = vmatprep.subr.mxu0 0.0
        %567 = vmatpush2.msra.mxu0 0.0
        %568 = vmatprep.subr.mxu0 0.0
        %569 = vmatpush2.msra.mxu0 0.0
        %570 = vmatprep.subr.mxu0 0.0
        %571 = vmatpush2.msra.mxu0 0.0
        %572 = vmatprep.subr.mxu0 0.0
        %573 = vmatpush2.msra.mxu0 0.0
        %574 = vmatprep.subr.mxu0 0.0
        %575 = vmatpush2.msra.mxu0 0.0
        %576 = vmatprep.subr.mxu0 0.0
        %577 = vmatpush2.msra.mxu0 0.0
        %578 = vmatprep.subr.mxu0 0.0
        %579 = vmatpush2.msra.mxu0 0.0
        %580 = vmatprep.subr.mxu0 0.0
        %581 = vmatpush2.msra.mxu0 0.0
        %582 = vmatprep.mubr.f32.mxu0 0.0
        %583 = vmatmul.mubr.f32.gmra.mxu0 %v441
        %v584 = vpop.f32.mrf.mxu0
        %v585 = vadd.f32 0.0, %v584
        %v586 = vpop.f32.mrf.mxu0
        %587 = vdwg.mxu0
        %v588 = vrcp.pop %v585
        %v589 = vmul.f32 %v510, %v588
        %590 = vst [vmem:[%s254] sm:$0xff] %v589
        %s591 = sand.u32 %s141, 1
        %s592 = scalar_lea.sflag [#allocation4], %s591
        %s593 = sand.u32 %s141, 1
        %s594 = smul.addr %s593, 8
        %s595 = scalar_lea.vmem [#allocation7], %s594
        // Predicated region
        $region49: #{tpu_custom_call.1} parent=39 // pred_check
          %p596 = pneg %p151
        $region50: #{tpu_custom_call.1} parent=39 // pred_check_branch
          %598 = sbr.rel (%p596) target = $region52
        $region51: #{tpu_custom_call.1} parent=39 // pred_region
          %s600 = ssub.s32 128, 128
          %601 = vsyncadd %s592, %s600
          %s602 = smul.addr %s23, 128
          %s603 = scalar_lea.hbm %s5, %s602
          %s605 = sshll.u32 %s595, 4
          %s606 = int_to_ptr.vmem [resolvable:$true] %s605
          %608 = dma.vmem_to_hbm [thread:$0]  %s606, 128, %s603, %s592
        $region52: #{tpu_custom_call.1} parent=39 // pred_fallthru
          _
      $region40: #{tpu_custom_call.1} parent=5 // pred_fallthru
        _
      %p609 = scmp.le.s32.totalorder 2, %s18
      // Predicated region
      $region53: #{tpu_custom_call.1} parent=5 // pred_check
        %p610 = pneg %p609
      $region54: #{tpu_custom_call.1} parent=5 // pred_check_branch
        %612 = sbr.rel (%p610) target = $region56
      $region55: #{tpu_custom_call.1} parent=5 // pred_region
        %s613 = ssub.s32 %s18, 2
        // Predicated region
        $region57: #{tpu_custom_call.1} parent=55 // pred_check
          %p614 = pneg %p157
        $region58: #{tpu_custom_call.1} parent=55 // pred_check_branch
          %616 = sbr.rel (%p614) target = $region60
        $region59: #{tpu_custom_call.1} parent=55 // pred_region
          %s617 = sand.u32 %s142, 1
          %s618 = scalar_lea.sflag [#allocation4], %s617
          %s619 = sand.u32 %s142, 1
          %s620 = smul.addr %s619, 8
          %s621 = scalar_lea.vmem [#allocation7], %s620
          %622 = dma.done %s618, 128
        $region60: #{tpu_custom_call.1} parent=55 // pred_fallthru
          _
      $region56: #{tpu_custom_call.1} parent=5 // pred_fallthru
        _
    $region6: #{tpu_custom_call.1} parent=1 // loop_footer
      %s22 = sadd.s32 1, %s18
    $region7: #{tpu_custom_call.1} parent=1 // loop_footer_branch
      %17 = sbr.rel target = $region3
    $region8: #{tpu_custom_call.1} parent=1 // loop_exit
      _
    %623 = vsyncpa [#allocation3], 1
    %s624 = scalar_lea.sflag [#allocation3], 1
    %625 = vsyncpa %s624, 1
    %626 = vsyncpa [#allocation6], 1
    %627 = vsyncpa [#allocation4], 1
    %s628 = scalar_lea.sflag [#allocation4], 1
    %629 = vsyncpa %s628, 1

</llo_original>
